<compile_context>
chip_gen: v6e
topology: v6e:2x2x1
jax: 0.10.0
libtpu: 0.0.40
codegen_flags: <defaults>
</compile_context>

<pallas_src>
import functools

import jax
import jax.numpy as jnp
from jax.experimental import pallas as pl
from jax.experimental.pallas import tpu as pltpu

EPS = 1e-5
NEG_SLOPE = 0.2
_SMALL_CIN_VPU = 4                  # C_in <= this -> skip MXU, use VPU broadcast FMAs
_VMEM_LIMIT = 48 * 1024 * 1024      # explicit scoped-VMEM limit (safe on v5e/v6e/v7x)


def _round_up(x, m):
    return (x + m - 1) // m * m


def _pad_to(a, shape):
    if tuple(a.shape) == tuple(shape):
        return a
    return jnp.pad(a, [(0, t - s) for s, t in zip(a.shape, shape)])


def _tile_matmul(w, x, c_in):
    """y(C_out_pad, TL) = w(C_out_pad, C_in_pad) @ x(C_in_pad, TL)."""
    if c_in <= _SMALL_CIN_VPU:
        # Tiny contraction: the systolic array would be mostly zero padding; do it as
        # c_in broadcast multiply-adds on the (otherwise idle) VPU instead.
        y = w[:, 0:1] * x[0:1, :]
        for c in range(1, c_in):
            y = y + w[:, c:c + 1] * x[c:c + 1, :]
        return y
    return jnp.dot(w, x, preferred_element_type=jnp.float32)


def _stats_kernel(x_ref, w_ref, g_ref, b_ref, scale_ref, shift_ref, *,
                  c_in, inv_count):
    """Pass 1: accumulate per-channel sum / sum-of-squares of y = W @ x; on the last
    grid step fold them with gamma/beta into the BN affine (scale, shift)."""
    n_i = pl.program_id(0)
    l_i = pl.program_id(1)
    is_first = jnp.logical_and(n_i == 0, l_i == 0)
    is_last = jnp.logical_and(n_i == pl.num_programs(0) - 1,
                              l_i == pl.num_programs(1) - 1)

    @pl.when(is_first)
    def _():
        scale_ref[...] = jnp.zeros_like(scale_ref)    # running sum(y)
        shift_ref[...] = jnp.zeros_like(shift_ref)    # running sum(y*y)

    # Conv bias is omitted: training-mode BN cancels it exactly.
    y = _tile_matmul(w_ref[...], x_ref[0], c_in)      # (C_out_pad, TL) f32
    # Lane-axis (XLU) reductions; zero-padded L columns contribute exactly 0.
    scale_ref[...] += jnp.sum(y, axis=-1, keepdims=True)
    shift_ref[...] += jnp.sum(y * y, axis=-1, keepdims=True)

    @pl.when(is_last)
    def _():
        mean = scale_ref[...] * inv_count
        var = jnp.maximum(shift_ref[...] * inv_count - mean * mean, 0.0)
        scale = g_ref[...] * jax.lax.rsqrt(var + EPS)
        shift = b_ref[...] - mean * scale
        scale_ref[...] = scale
        shift_ref[...] = shift


def _apply_kernel(x_ref, w_ref, scale_ref, shift_ref, o_ref, *, c_in):
    """Pass 2: y = W @ x; write leaky_relu(y * scale + shift)."""
    y = _tile_matmul(w_ref[...], x_ref[0], c_in)      # (C_out_pad, TL) f32
    z = y * scale_ref[...] + shift_ref[...]
    o_ref[0] = jnp.where(z >= 0, z, NEG_SLOPE * z).astype(o_ref.dtype)


def pointnet_conv1d(x, w, b, gamma, beta, *, tile_l=None):
    """PointNetConv1d forward (bn=True, training-mode batch statistics).

    x: (N, C_in, L) f32;  w: (C_out, C_in) (Conv1d k=1 weight squeezed);
    b: (C_out,) conv bias (mathematically a no-op under BN, kept for parity);
    gamma/beta: (C_out,) BatchNorm1d weight/bias.  Returns (N, C_out, L) f32.
    """
    del b  # exactly cancelled by the BN mean subtraction
    N, C_in, L = x.shape
    C_out = w.shape[0]

    c_in_p = _round_up(C_in, 8)      # sublane axis of x / lane axis of w
    c_out_p = _round_up(C_out, 8)    # sublane axis of the output

    if tile_l is None:
        # Lane tile: multiple of 128, sized so double-buffered (x, out) blocks stay a
        # few MiB (fits v7x's 64 MiB VMEM with headroom, still amortizes grid overhead).
        tile_l = min(512, _round_up(L, 128))
        while tile_l > 128 and (c_in_p + c_out_p) * tile_l * 4 * 2 > (8 << 20):
            tile_l //= 2
    l_pad = _round_up(L, tile_l)

    x_p = _pad_to(x.astype(jnp.float32), (N, c_in_p, l_pad))        # zero padded
    w_p = _pad_to(w.astype(jnp.float32), (c_out_p, c_in_p))
    g_p = _pad_to(gamma.astype(jnp.float32), (c_out_p,)).reshape(c_out_p, 1)
    be_p = _pad_to(beta.astype(jnp.float32), (c_out_p,)).reshape(c_out_p, 1)

    grid = (N, l_pad // tile_l)
    x_spec = pl.BlockSpec((1, c_in_p, tile_l), lambda n, l: (n, 0, l))
    w_spec = pl.BlockSpec((c_out_p, c_in_p), lambda n, l: (0, 0))
    vec_spec = pl.BlockSpec((c_out_p, 1), lambda n, l: (0, 0))

    # ---- pass 1: BN statistics -> per-channel (scale, shift) --------------------
    scale, shift = pl.pallas_call(
        functools.partial(_stats_kernel, c_in=C_in, inv_count=1.0 / float(N * L)),
        out_shape=(jax.ShapeDtypeStruct((c_out_p, 1), jnp.float32),
                   jax.ShapeDtypeStruct((c_out_p, 1), jnp.float32)),
        grid_spec=pltpu.PrefetchScalarGridSpec(
            num_scalar_prefetch=0,
            grid=grid,
            in_specs=[x_spec, w_spec, vec_spec, vec_spec],
            out_specs=(vec_spec, vec_spec)),
        compiler_params=pltpu.CompilerParams(
            dimension_semantics=("arbitrary", "arbitrary"),
            vmem_limit_bytes=_VMEM_LIMIT),
    )(x_p, w_p, g_p, be_p)

    # ---- pass 2: normalize + LeakyReLU, lane-dense (N, C_out_pad, L_pad) output --
    out_p = pl.pallas_call(
        functools.partial(_apply_kernel, c_in=C_in),
        out_shape=jax.ShapeDtypeStruct((N, c_out_p, l_pad), jnp.float32),
        grid_spec=pltpu.PrefetchScalarGridSpec(
            num_scalar_prefetch=0,
            grid=grid,
            in_specs=[x_spec, w_spec, vec_spec, vec_spec],
            out_specs=pl.BlockSpec((1, c_out_p, tile_l), lambda n, l: (n, 0, l))),
        compiler_params=pltpu.CompilerParams(
            dimension_semantics=("parallel", "parallel"),
            vmem_limit_bytes=_VMEM_LIMIT),
    )(x_p, w_p, scale, shift)

    if (c_out_p, l_pad) != (C_out, L):
        out_p = out_p[:, :C_out, :L]
    return out_p


def _reference(x, w, b, gamma, beta):
    # Pure-JAX reference (Conv1d k=1 + training-mode BN + LeakyReLU), full f32 matmul.
    y = jnp.einsum("ncl,oc->nol", x, w,
                   precision=jax.lax.Precision.HIGHEST) + b[None, :, None]
    mean = jnp.mean(y, axis=(0, 2), keepdims=True)
    var = jnp.mean((y - mean) ** 2, axis=(0, 2), keepdims=True)
    y_hat = (y - mean) / jnp.sqrt(var + EPS)
    z = gamma[None, :, None] * y_hat + beta[None, :, None]
    return jnp.where(z >= 0, z, NEG_SLOPE * z)


def _run_case(key, N, C_in, C_out, L, atol, rtol):
    k1, k2, k3, k4, k5 = jax.random.split(key, 5)
    x = jax.random.normal(k1, (N, C_in, L), dtype=jnp.float32)
    w = 0.1 * jax.random.normal(k2, (C_out, C_in), dtype=jnp.float32)      # Conv1d weight
    b = 0.1 * jax.random.normal(k3, (C_out,), dtype=jnp.float32)           # Conv1d bias
    gamma = 1.0 + 0.1 * jax.random.normal(k4, (C_out,), dtype=jnp.float32)  # BN weight
    beta = 0.1 * jax.random.normal(k5, (C_out,), dtype=jnp.float32)         # BN bias

    out = pointnet_conv1d(x, w, b, gamma, beta)
    jax.block_until_ready(out)

    ref = _reference(x, w, b, gamma, beta)
    assert out.shape == (N, C_out, L)
    assert jnp.allclose(out, ref, atol=atol, rtol=rtol), (
        float(jnp.max(jnp.abs(out - ref))))
    return out


if __name__ == "__main__":
    key = jax.random.PRNGKey(0)
    k_a, k_b = jax.random.split(key)

    # Small-contraction case (like the xyz input layer): VPU FMA path, heavy lane
    # padding (L=16 -> 128). Tight tolerance (kernel math is full f32).
    _run_case(k_a, N=2, C_in=4, C_out=8, L=16, atol=1e-4, rtol=1e-4)

    # MXU path with non-multiple-of-8 C_out and non-multiple-of-128 L (exercises
    # channel + lane padding). Looser tolerance: the kernel's jnp.dot uses the TPU
    # default (reduced-input-precision) matmul vs the full-f32 reference.
    _run_case(k_b, N=2, C_in=12, C_out=20, L=40, atol=1e-2, rtol=1e-2)

    print("KERNEL_OK")
</pallas_src>

<mosaic_0001>
module attributes {stable_mosaic.version = 11 : i64} {
  func.func @_stats_kernel(%arg0: i32, %arg1: i32, %arg2: memref<1x8x128xf32, #tpu.memory_space<vmem>>, %arg3: memref<8x8xf32, #tpu.memory_space<vmem>>, %arg4: memref<8x1xf32, #tpu.memory_space<vmem>>, %arg5: memref<8x1xf32, #tpu.memory_space<vmem>>, %arg6: memref<8x1xf32, #tpu.memory_space<vmem>>, %arg7: memref<8x1xf32, #tpu.memory_space<vmem>>) attributes {dimension_semantics = [#tpu.dimension_semantics<arbitrary>, #tpu.dimension_semantics<arbitrary>], iteration_bounds = array<i64: 2, 1>, scalar_prefetch = 0 : i64, scratch_operands = 0 : i64, tpu.core_type = #tpu.core_type<tc>, window_params = [{transform_indices = @transform_0, window_bounds = array<i64: 1, 8, 128>}, {pipeline_mode = #tpu.pipeline_mode<synchronous>, transform_indices = @transform_1, window_bounds = array<i64: 8, 8>}, {pipeline_mode = #tpu.pipeline_mode<synchronous>, transform_indices = @transform_2, window_bounds = array<i64: 8, 1>}, {pipeline_mode = #tpu.pipeline_mode<synchronous>, transform_indices = @transform_3, window_bounds = array<i64: 8, 1>}, {pipeline_mode = #tpu.pipeline_mode<synchronous>, transform_indices = @transform_4, window_bounds = array<i64: 8, 1>}, {pipeline_mode = #tpu.pipeline_mode<synchronous>, transform_indices = @transform_5, window_bounds = array<i64: 8, 1>}]} {
    %c0_i32 = arith.constant 0 : i32
    %0 = arith.cmpi eq, %arg0, %c0_i32 : i32
    %c0_i32_0 = arith.constant 0 : i32
    %1 = arith.cmpi eq, %arg1, %c0_i32_0 : i32
    %2 = arith.andi %0, %1 : i1
    %c1_i32 = arith.constant 1 : i32
    %3 = arith.cmpi eq, %arg0, %c1_i32 : i32
    %c0_i32_1 = arith.constant 0 : i32
    %4 = arith.cmpi eq, %arg1, %c0_i32_1 : i32
    %5 = arith.andi %3, %4 : i1
    %6 = arith.extui %2 : i1 to i32
    %c0_i32_2 = arith.constant 0 : i32
    %7 = arith.cmpi ne, %6, %c0_i32_2 : i32
    scf.if %7 {
      %cst_17 = arith.constant 0.000000e+00 : f32
      %47 = vector.broadcast %cst_17 : f32 to vector<8x1xf32>
      %c0_18 = arith.constant 0 : index
      %c0_19 = arith.constant 0 : index
      %48 = vector.load %arg6[%c0_18, %c0_19] : memref<8x1xf32, #tpu.memory_space<vmem>>, vector<8x1xf32>
      tpu.vector_store %arg6[%c0_18, %c0_19], %47 {strides = array<i32>} : memref<8x1xf32, #tpu.memory_space<vmem>>, vector<8x1xf32>,
      %cst_20 = arith.constant 0.000000e+00 : f32
      %49 = vector.broadcast %cst_20 : f32 to vector<8x1xf32>
      %c0_21 = arith.constant 0 : index
      %c0_22 = arith.constant 0 : index
      %50 = vector.load %arg7[%c0_21, %c0_22] : memref<8x1xf32, #tpu.memory_space<vmem>>, vector<8x1xf32>
      tpu.vector_store %arg7[%c0_21, %c0_22], %49 {strides = array<i32>} : memref<8x1xf32, #tpu.memory_space<vmem>>, vector<8x1xf32>,
    } else {
    }
    %c0 = arith.constant 0 : index
    %c0_3 = arith.constant 0 : index
    %8 = vector.load %arg3[%c0, %c0_3] : memref<8x8xf32, #tpu.memory_space<vmem>>, vector<8x8xf32>
    %c0_4 = arith.constant 0 : index
    %c0_5 = arith.constant 0 : index
    %c0_6 = arith.constant 0 : index
    %9 = vector.load %arg2[%c0_4, %c0_5, %c0_6] : memref<1x8x128xf32, #tpu.memory_space<vmem>>, vector<1x8x128xf32>
    %10 = vector.shape_cast %9 : vector<1x8x128xf32> to vector<8x128xf32>
    %11 = vector.extract_strided_slice %8 {offsets = [0, 0], sizes = [8, 1], strides = [1, 1]} : vector<8x8xf32> to vector<8x1xf32>
    %12 = vector.extract_strided_slice %10 {offsets = [0, 0], sizes = [1, 128], strides = [1, 1]} : vector<8x128xf32> to vector<1x128xf32>
    %13 = vector.broadcast %11 : vector<8x1xf32> to vector<8x128xf32>
    %14 = vector.broadcast %12 : vector<1x128xf32> to vector<8x128xf32>
    %15 = arith.mulf %13, %14 : vector<8x128xf32>
    %16 = vector.extract_strided_slice %8 {offsets = [0, 1], sizes = [8, 1], strides = [1, 1]} : vector<8x8xf32> to vector<8x1xf32>
    %17 = vector.extract_strided_slice %10 {offsets = [1, 0], sizes = [1, 128], strides = [1, 1]} : vector<8x128xf32> to vector<1x128xf32>
    %18 = vector.broadcast %16 : vector<8x1xf32> to vector<8x128xf32>
    %19 = vector.broadcast %17 : vector<1x128xf32> to vector<8x128xf32>
    %20 = arith.mulf %18, %19 : vector<8x128xf32>
    %21 = arith.addf %15, %20 : vector<8x128xf32>
    %22 = vector.extract_strided_slice %8 {offsets = [0, 2], sizes = [8, 1], strides = [1, 1]} : vector<8x8xf32> to vector<8x1xf32>
    %23 = vector.extract_strided_slice %10 {offsets = [2, 0], sizes = [1, 128], strides = [1, 1]} : vector<8x128xf32> to vector<1x128xf32>
    %24 = vector.broadcast %22 : vector<8x1xf32> to vector<8x128xf32>
    %25 = vector.broadcast %23 : vector<1x128xf32> to vector<8x128xf32>
    %26 = arith.mulf %24, %25 : vector<8x128xf32>
    %27 = arith.addf %21, %26 : vector<8x128xf32>
    %28 = vector.extract_strided_slice %8 {offsets = [0, 3], sizes = [8, 1], strides = [1, 1]} : vector<8x8xf32> to vector<8x1xf32>
    %29 = vector.extract_strided_slice %10 {offsets = [3, 0], sizes = [1, 128], strides = [1, 1]} : vector<8x128xf32> to vector<1x128xf32>
    %30 = vector.broadcast %28 : vector<8x1xf32> to vector<8x128xf32>
    %31 = vector.broadcast %29 : vector<1x128xf32> to vector<8x128xf32>
    %32 = arith.mulf %30, %31 : vector<8x128xf32>
    %33 = arith.addf %27, %32 : vector<8x128xf32>
    %c0_7 = arith.constant 0 : index
    %c0_8 = arith.constant 0 : index
    %34 = vector.load %arg6[%c0_7, %c0_8] : memref<8x1xf32, #tpu.memory_space<vmem>>, vector<8x1xf32>
    %cst = arith.constant dense<0.000000e+00> : vector<8xf32>
    %35 = vector.multi_reduction <add>, %33, %cst [1] : vector<8x128xf32> to vector<8xf32>
    %36 = vector.shape_cast %35 : vector<8xf32> to vector<8x1xf32>
    %37 = arith.addf %34, %36 : vector<8x1xf32>
    %c0_9 = arith.constant 0 : index
    %c0_10 = arith.constant 0 : index
    %38 = vector.load %arg6[%c0_9, %c0_10] : memref<8x1xf32, #tpu.memory_space<vmem>>, vector<8x1xf32>
    tpu.vector_store %arg6[%c0_9, %c0_10], %37 {strides = array<i32>} : memref<8x1xf32, #tpu.memory_space<vmem>>, vector<8x1xf32>,
    %c0_11 = arith.constant 0 : index
    %c0_12 = arith.constant 0 : index
    %39 = vector.load %arg7[%c0_11, %c0_12] : memref<8x1xf32, #tpu.memory_space<vmem>>, vector<8x1xf32>
    %40 = arith.mulf %33, %33 : vector<8x128xf32>
    %cst_13 = arith.constant dense<0.000000e+00> : vector<8xf32>
    %41 = vector.multi_reduction <add>, %40, %cst_13 [1] : vector<8x128xf32> to vector<8xf32>
    %42 = vector.shape_cast %41 : vector<8xf32> to vector<8x1xf32>
    %43 = arith.addf %39, %42 : vector<8x1xf32>
    %c0_14 = arith.constant 0 : index
    %c0_15 = arith.constant 0 : index
    %44 = vector.load %arg7[%c0_14, %c0_15] : memref<8x1xf32, #tpu.memory_space<vmem>>, vector<8x1xf32>
    tpu.vector_store %arg7[%c0_14, %c0_15], %43 {strides = array<i32>} : memref<8x1xf32, #tpu.memory_space<vmem>>, vector<8x1xf32>,
    %45 = arith.extui %5 : i1 to i32
    %c0_i32_16 = arith.constant 0 : i32
    %46 = arith.cmpi ne, %45, %c0_i32_16 : i32
    scf.if %46 {
      %c0_17 = arith.constant 0 : index
      %c0_18 = arith.constant 0 : index
      %47 = vector.load %arg6[%c0_17, %c0_18] : memref<8x1xf32, #tpu.memory_space<vmem>>, vector<8x1xf32>
      %cst_19 = arith.constant 3.125000e-02 : f32
      %48 = vector.broadcast %cst_19 : f32 to vector<8x1xf32>
      %49 = arith.mulf %47, %48 : vector<8x1xf32>
      %c0_20 = arith.constant 0 : index
      %c0_21 = arith.constant 0 : index
      %50 = vector.load %arg7[%c0_20, %c0_21] : memref<8x1xf32, #tpu.memory_space<vmem>>, vector<8x1xf32>
      %cst_22 = arith.constant 3.125000e-02 : f32
      %51 = vector.broadcast %cst_22 : f32 to vector<8x1xf32>
      %52 = arith.mulf %50, %51 : vector<8x1xf32>
      %53 = arith.mulf %49, %49 : vector<8x1xf32>
      %54 = arith.subf %52, %53 : vector<8x1xf32>
      %cst_23 = arith.constant 0.000000e+00 : f32
      %55 = vector.broadcast %cst_23 : f32 to vector<8x1xf32>
      %56 = arith.maximumf %54, %55 : vector<8x1xf32>
      %c0_24 = arith.constant 0 : index
      %c0_25 = arith.constant 0 : index
      %57 = vector.load %arg4[%c0_24, %c0_25] : memref<8x1xf32, #tpu.memory_space<vmem>>, vector<8x1xf32>
      %cst_26 = arith.constant 9.99999974E-6 : f32
      %58 = vector.broadcast %cst_26 : f32 to vector<8x1xf32>
      %59 = arith.addf %56, %58 : vector<8x1xf32>
      %60 = math.rsqrt %59 : vector<8x1xf32>
      %61 = arith.mulf %57, %60 : vector<8x1xf32>
      %c0_27 = arith.constant 0 : index
      %c0_28 = arith.constant 0 : index
      %62 = vector.load %arg5[%c0_27, %c0_28] : memref<8x1xf32, #tpu.memory_space<vmem>>, vector<8x1xf32>
      %63 = arith.mulf %49, %61 : vector<8x1xf32>
      %64 = arith.subf %62, %63 : vector<8x1xf32>
      %c0_29 = arith.constant 0 : index
      %c0_30 = arith.constant 0 : index
      %65 = vector.load %arg6[%c0_29, %c0_30] : memref<8x1xf32, #tpu.memory_space<vmem>>, vector<8x1xf32>
      tpu.vector_store %arg6[%c0_29, %c0_30], %61 {strides = array<i32>} : memref<8x1xf32, #tpu.memory_space<vmem>>, vector<8x1xf32>,
      %c0_31 = arith.constant 0 : index
      %c0_32 = arith.constant 0 : index
      %66 = vector.load %arg7[%c0_31, %c0_32] : memref<8x1xf32, #tpu.memory_space<vmem>>, vector<8x1xf32>
      tpu.vector_store %arg7[%c0_31, %c0_32], %64 {strides = array<i32>} : memref<8x1xf32, #tpu.memory_space<vmem>>, vector<8x1xf32>,
    } else {
    }
    return
  }
  func.func @transform_0(%arg0: i32, %arg1: i32) -> (i32, i32, i32) {
    %c0_i32 = arith.constant 0 : i32
    %c0_i32_0 = arith.constant 0 : i32
    return %arg0, %c0_i32, %arg1 : i32, i32, i32
  }
  func.func @transform_1(%arg0: i32, %arg1: i32) -> (i32, i32) {
    %c0_i32 = arith.constant 0 : i32
    %c0_i32_0 = arith.constant 0 : i32
    %c0_i32_1 = arith.constant 0 : i32
    return %c0_i32, %c0_i32_0 : i32, i32
  }
  func.func @transform_2(%arg0: i32, %arg1: i32) -> (i32, i32) {
    %c0_i32 = arith.constant 0 : i32
    %c0_i32_0 = arith.constant 0 : i32
    %c0_i32_1 = arith.constant 0 : i32
    return %c0_i32, %c0_i32_0 : i32, i32
  }
  func.func @transform_3(%arg0: i32, %arg1: i32) -> (i32, i32) {
    %c0_i32 = arith.constant 0 : i32
    %c0_i32_0 = arith.constant 0 : i32
    %c0_i32_1 = arith.constant 0 : i32
    return %c0_i32, %c0_i32_0 : i32, i32
  }
  func.func @transform_4(%arg0: i32, %arg1: i32) -> (i32, i32) {
    %c0_i32 = arith.constant 0 : i32
    %c0_i32_0 = arith.constant 0 : i32
    %c0_i32_1 = arith.constant 0 : i32
    return %c0_i32, %c0_i32_0 : i32, i32
  }
  func.func @transform_5(%arg0: i32, %arg1: i32) -> (i32, i32) {
    %c0_i32 = arith.constant 0 : i32
    %c0_i32_0 = arith.constant 0 : i32
    %c0_i32_1 = arith.constant 0 : i32
    return %c0_i32, %c0_i32_0 : i32, i32
  }
}

</mosaic_0001>

<llo_original>
// kernel: tpu_custom_call.1
$region0: #{tpu_custom_call.1}
  #allocation0 [shape = 'u32[]', space=smem, size = 0x4, offset = 0x4, fixed_abs, tag = 'smem constant byte address 0x4 - core index']
  #allocation1 [shape = 'u32[144,128]{1,0:T(1,128)}', space=vmem, size = 0x12000, scoped, tag = 'internal scratch']
  %s0 = inlined_call_operand.vmem [shape: f32[2,8,128], index: 0, kind: input, shape index: {}]
  %s1 = inlined_call_operand.hbm [shape: f32[8,8], index: 1, kind: input, shape index: {}]
  %s2 = inlined_call_operand.vmem [shape: f32[8,1], index: 2, kind: input, shape index: {}]
  %s3 = inlined_call_operand.vmem [shape: f32[8,1], index: 3, kind: input, shape index: {}]
  %s4 = inlined_call_operand.vmem [shape: f32[8,1], index: 4, kind: output, shape index: {0}]
  %s5 = inlined_call_operand.vmem [shape: f32[8,1], index: 5, kind: output, shape index: {1}]
  %6 = xla_tuple %s4, %s5
  %s7 = sld [smem:[#allocation0]]
  $region69: #{tpu_custom_call.1} parent=0
    _
  %s9 = ssub.s32 1, %s7
  %s10 = scalar_select 0, %s9, %s7
  $region1: #{tpu_custom_call.1} parent=0
    #allocation2 [shape = 'u8[4096]{0}', space=vmem, size = 0x1000, scoped, tag = 'input window, operand 1, single buffered']
    #allocation3 [shape = 's32[2]{0}', space=sflag, size = 0x8, scoped, tag = 'scoped memory for tpu_custom_call.1']
    %11 = vsyncpa [#allocation3], 0
    loop: start=0, step=1, limit=4
    $region2: #{tpu_custom_call.1} parent=1 // loop_pre_header
      _
    $region3: #{tpu_custom_call.1} parent=1 // loop_header
      %s13 = sphi 0, %s17
      %p14 = scmp.ge.s32.totalorder %s13, 4
      %s20 = sphi 0, %s32
      %s21 = sphi 0, %s28
      %s22 = sphi 0, %s20
      %s23 = sphi 0, %s21
      %s24 = sphi 0, %s22
      %s25 = sphi 0, %s23
      %s37 = sphi 0, %s39
      %s40 = sphi 0, %s37
      %s41 = sphi 0, %s40
      %s57 = sphi 0, %s41
      %s61 = sphi 0, %s61
      %s63 = sphi 0, %s61
      %s64 = sphi 0, %s63
      %s78 = sphi 0, %s64
      %s82 = sphi 0, %s82
      %s84 = sphi 0, %s82
      %s85 = sphi 0, %s84
      %s99 = sphi 0, %s85
      %s103 = sphi 0, %s103
      %s105 = sphi 0, %s103
      %s106 = sphi 0, %s105
      %s120 = sphi 0, %s106
      %s124 = sphi 0, %s124
      %s126 = sphi 0, %s124
      %s127 = sphi 0, %s126
      %s141 = sphi 0, %s127
      %s145 = sphi 0, %s145
      %s147 = sphi 0, %s145
      %s148 = sphi 0, %s147
      %s162 = sphi 0, %s148
    $region4: #{tpu_custom_call.1} parent=1 // loop_header_branch
      %16 = sbr.rel (%p14) target = $region8
    $region5: #{tpu_custom_call.1} parent=1 // loop_body
      %s18 = ssub.s32 %s13, 1
      %s19 = ssub.s32 %s13, 2
      %s26 = sadd.s32 1, %s21
      %p27 = scmp.ge.s32.totalorder %s26, 1
      %s28 = scalar_select %p27, 0, %s26
      %s29 = sadd.s32 1, %s20
      %s30 = scalar_select %p27, %s29, %s20
      %p31 = scmp.ge.s32.totalorder %s30, 2
      %s32 = scalar_select %p31, 0, %s30
      %s33 = ssub.s32 %s20, %s32
      %s34 = ssub.s32 %s21, %s28
      %s35 = sor.u32 %s33, %s34
      %p36 = scmp.eq.s32.totalorder %s35, 0
      %s38 = sadd.s32 %s37, 1
      %s39 = scalar_select %p36, %s37, %s38
      %p42 = pneg %p36
      %p43 = scmp.eq.s32.totalorder %s13, 1
      %p44 = por %p42, %p43
      %p45 = scmp.ne.s32.totalorder %s37, %s40
      %p46 = scmp.eq.s32.totalorder %s13, 0
      %p47 = por %p45, %p46
      %p48 = scmp.ne.s32.totalorder %s37, %s40
      %p49 = scmp.eq.s32.totalorder %s18, 1
      %p50 = por %p48, %p49
      %p51 = scmp.ne.s32.totalorder %s40, %s41
      %p52 = scmp.eq.s32.totalorder %s18, 0
      %p53 = por %p51, %p52
      %p54 = scmp.ne.s32.totalorder %s40, %s41
      %p55 = scmp.eq.s32.totalorder %s19, 1
      %p56 = por %p54, %p55
      %p58 = scmp.ne.s32.totalorder %s41, %s57
      %p59 = scmp.eq.s32.totalorder %s19, 0
      %p60 = por %p58, %p59
      %s62 = sadd.s32 %s61, 1
      %p65 = scmp.eq.s32.totalorder %s13, 1
      %p66 = scmp.ne.s32.totalorder %s61, %s63
      %p67 = scmp.eq.s32.totalorder %s13, 0
      %p68 = por %p66, %p67
      %p69 = scmp.ne.s32.totalorder %s61, %s63
      %p70 = scmp.eq.s32.totalorder %s18, 1
      %p71 = por %p69, %p70
      %p72 = scmp.ne.s32.totalorder %s63, %s64
      %p73 = scmp.eq.s32.totalorder %s18, 0
      %p74 = por %p72, %p73
      %p75 = scmp.ne.s32.totalorder %s63, %s64
      %p76 = scmp.eq.s32.totalorder %s19, 1
      %p77 = por %p75, %p76
      %p79 = scmp.ne.s32.totalorder %s64, %s78
      %p80 = scmp.eq.s32.totalorder %s19, 0
      %p81 = por %p79, %p80
      %s83 = sadd.s32 %s82, 1
      %p86 = scmp.eq.s32.totalorder %s13, 1
      %p87 = scmp.ne.s32.totalorder %s82, %s84
      %p88 = scmp.eq.s32.totalorder %s13, 0
      %p89 = por %p87, %p88
      %p90 = scmp.ne.s32.totalorder %s82, %s84
      %p91 = scmp.eq.s32.totalorder %s18, 1
      %p92 = por %p90, %p91
      %p93 = scmp.ne.s32.totalorder %s84, %s85
      %p94 = scmp.eq.s32.totalorder %s18, 0
      %p95 = por %p93, %p94
      %p96 = scmp.ne.s32.totalorder %s84, %s85
      %p97 = scmp.eq.s32.totalorder %s19, 1
      %p98 = por %p96, %p97
      %p100 = scmp.ne.s32.totalorder %s85, %s99
      %p101 = scmp.eq.s32.totalorder %s19, 0
      %p102 = por %p100, %p101
      %s104 = sadd.s32 %s103, 1
      %p107 = scmp.eq.s32.totalorder %s13, 1
      %p108 = scmp.ne.s32.totalorder %s103, %s105
      %p109 = scmp.eq.s32.totalorder %s13, 0
      %p110 = por %p108, %p109
      %p111 = scmp.ne.s32.totalorder %s103, %s105
      %p112 = scmp.eq.s32.totalorder %s18, 1
      %p113 = por %p111, %p112
      %p114 = scmp.ne.s32.totalorder %s105, %s106
      %p115 = scmp.eq.s32.totalorder %s18, 0
      %p116 = por %p114, %p115
      %p117 = scmp.ne.s32.totalorder %s105, %s106
      %p118 = scmp.eq.s32.totalorder %s19, 1
      %p119 = por %p117, %p118
      %p121 = scmp.ne.s32.totalorder %s106, %s120
      %p122 = scmp.eq.s32.totalorder %s19, 0
      %p123 = por %p121, %p122
      %s125 = sadd.s32 %s124, 1
      %p128 = scmp.eq.s32.totalorder %s13, 1
      %p129 = scmp.ne.s32.totalorder %s124, %s126
      %p130 = scmp.eq.s32.totalorder %s13, 0
      %p131 = por %p129, %p130
      %p132 = scmp.ne.s32.totalorder %s124, %s126
      %p133 = scmp.eq.s32.totalorder %s18, 1
      %p134 = por %p132, %p133
      %p135 = scmp.ne.s32.totalorder %s126, %s127
      %p136 = scmp.eq.s32.totalorder %s18, 0
      %p137 = por %p135, %p136
      %p138 = scmp.ne.s32.totalorder %s126, %s127
      %p139 = scmp.eq.s32.totalorder %s19, 1
      %p140 = por %p138, %p139
      %p142 = scmp.ne.s32.totalorder %s127, %s141
      %p143 = scmp.eq.s32.totalorder %s19, 0
      %p144 = por %p142, %p143
      %s146 = sadd.s32 %s145, 1
      %p149 = scmp.eq.s32.totalorder %s13, 1
      %p150 = scmp.ne.s32.totalorder %s145, %s147
      %p151 = scmp.eq.s32.totalorder %s13, 0
      %p152 = por %p150, %p151
      %p153 = scmp.ne.s32.totalorder %s145, %s147
      %p154 = scmp.eq.s32.totalorder %s18, 1
      %p155 = por %p153, %p154
      %p156 = scmp.ne.s32.totalorder %s147, %s148
      %p157 = scmp.eq.s32.totalorder %s18, 0
      %p158 = por %p156, %p157
      %p159 = scmp.ne.s32.totalorder %s147, %s148
      %p160 = scmp.eq.s32.totalorder %s19, 1
      %p161 = por %p159, %p160
      %p163 = scmp.ne.s32.totalorder %s148, %s162
      %p164 = scmp.eq.s32.totalorder %s19, 0
      %p165 = por %p163, %p164
      %p166 = scmp.le.s32.totalorder 1, %s13
      %p167 = scmp.lt.s32.totalorder %s13, 3
      %p168 = pnand %p166, %p167
      %p169 = pneg %p168
      // Predicated region
      $region9: #{tpu_custom_call.1} parent=5 // pred_check
        _
      $region10: #{tpu_custom_call.1} parent=5 // pred_check_branch
        %171 = sbr.rel (%p168) target = $region12
      $region11: #{tpu_custom_call.1} parent=5 // pred_region
        %s172 = ssub.s32 %s13, 1
        // Predicated region
        $region13: #{tpu_custom_call.1} parent=11 // pred_check
          %p173 = pneg %p74
        $region14: #{tpu_custom_call.1} parent=11 // pred_check_branch
          %175 = sbr.rel (%p173) target = $region16
        $region15: #{tpu_custom_call.1} parent=11 // pred_region
          %s177 = ssub.s32 128, 128
          %178 = vsyncadd [#allocation3], %s177
          %s180 = sshll.u32 [#allocation2], 4
          %s181 = int_to_ptr.vmem [resolvable:$true] %s180
          %183 = dma.hbm_to_vmem [thread:$0]  %s1, 128, %s181, [#allocation3]
        $region16: #{tpu_custom_call.1} parent=11 // pred_fallthru
          _
        // Predicated region
        $region17: #{tpu_custom_call.1} parent=11 // pred_check
          %p184 = pneg %p95
        $region18: #{tpu_custom_call.1} parent=11 // pred_check_branch
          %186 = sbr.rel (%p184) target = $region20
        $region19: #{tpu_custom_call.1} parent=11 // pred_region
          _
        $region20: #{tpu_custom_call.1} parent=11 // pred_fallthru
          _
        // Predicated region
        $region21: #{tpu_custom_call.1} parent=11 // pred_check
          %p187 = pneg %p116
        $region22: #{tpu_custom_call.1} parent=11 // pred_check_branch
          %189 = sbr.rel (%p187) target = $region24
        $region23: #{tpu_custom_call.1} parent=11 // pred_region
          _
        $region24: #{tpu_custom_call.1} parent=11 // pred_fallthru
          _
      $region12: #{tpu_custom_call.1} parent=5 // pred_fallthru
        _
      %p190 = scmp.lt.s32.totalorder %s13, 2
      // Predicated region
      $region25: #{tpu_custom_call.1} parent=5 // pred_check
        %p191 = pneg %p190
      $region26: #{tpu_custom_call.1} parent=5 // pred_check_branch
        %193 = sbr.rel (%p191) target = $region28
      $region27: #{tpu_custom_call.1} parent=5 // pred_region
        // Predicated region
        $region29: #{tpu_custom_call.1} parent=27 // pred_check
          %p194 = pneg %p47
        $region30: #{tpu_custom_call.1} parent=27 // pred_check_branch
          %196 = sbr.rel (%p194) target = $region32
        $region31: #{tpu_custom_call.1} parent=27 // pred_region
          %p197 = scmp.lt.s32.totalorder %s20, 1
          %s198 = scalar_select %p197, %s20, 1
          %p199 = scmp.lt.s32.totalorder %s21, 0
          %s200 = scalar_select %p199, %s21, 0
          %s201 = sadd.s32 %s200, %s198
          %s202 = smul.addr %s201, 8
          %s203 = scalar_lea.vmem %s0, %s202
        $region32: #{tpu_custom_call.1} parent=27 // pred_fallthru
          _
      $region28: #{tpu_custom_call.1} parent=5 // pred_fallthru
        _
      %p204 = scmp.le.s32.totalorder 1, %s13
      %p205 = scmp.lt.s32.totalorder %s13, 3
      %p206 = pnand %p204, %p205
      %p207 = pneg %p206
      // Predicated region
      $region33: #{tpu_custom_call.1} parent=5 // pred_check
        _
      $region34: #{tpu_custom_call.1} parent=5 // pred_check_branch
        %209 = sbr.rel (%p206) target = $region36
      $region35: #{tpu_custom_call.1} parent=5 // pred_region
        %s210 = ssub.s32 %s13, 1
        // Predicated region
        $region37: #{tpu_custom_call.1} parent=35 // pred_check
          %p211 = pneg %p74
        $region38: #{tpu_custom_call.1} parent=35 // pred_check_branch
          %213 = sbr.rel (%p211) target = $region40
        $region39: #{tpu_custom_call.1} parent=35 // pred_region
          %214 = dma.done [#allocation3], 128
        $region40: #{tpu_custom_call.1} parent=35 // pred_fallthru
          _
        %p215 = scmp.lt.s32.totalorder %s22, 1
        %s216 = scalar_select %p215, %s22, 1
        %p217 = scmp.lt.s32.totalorder %s23, 0
        %s218 = scalar_select %p217, %s23, 0
        %s219 = sadd.s32 %s218, %s216
        %s220 = smul.addr %s219, 8
        %s221 = scalar_lea.vmem %s0, %s220
        %p222 = pneg %p53
        %p223 = pneg %p50
        %p224 = pneg %p74
        %p225 = pneg %p71
        %p226 = pneg %p95
        %p227 = pneg %p92
        %p228 = pneg %p116
        %p229 = pneg %p113
        %p230 = pneg %p137
        %p231 = pneg %p134
        %p232 = pneg %p158
        %p233 = pneg %p155
        %p234 = scmp.lt.s32.totalorder %s22, 1
        %s235 = scalar_select %p234, %s22, 1
        %p236 = scmp.lt.s32.totalorder %s23, 0
        %s237 = scalar_select %p236, %s23, 0
        %s238 = sadd.s32 %s237, %s235
        %s239 = smul.addr %s238, 8
        %s240 = scalar_lea.vmem %s0, %s239
        %p241 = scmp.eq.s32.totalorder %s22, 0
        %p242 = scmp.eq.s32.totalorder %s23, 0
        %p243 = pnand %p241, %p242
        %p244 = pneg %p243
        %p245 = scmp.eq.s32.totalorder %s22, 1
        %p246 = pnand %p245, %p242
        %p247 = pneg %p246
        // Predicated region
        $region41: #{tpu_custom_call.1} parent=35 // pred_check
          _
        $region42: #{tpu_custom_call.1} parent=35 // pred_check_branch
          %249 = sbr.rel (%p243) target = $region44
        $region43: #{tpu_custom_call.1} parent=35 // pred_region
          %vm250 = vcmask 7168
          %251 = vst.msk [vmem:[%s4] sm:$0xff] %vm250, 0.0
          %252 = vst.msk [vmem:[%s5] sm:$0xff] %vm250, 0.0
        $region44: #{tpu_custom_call.1} parent=35 // pred_fallthru
          _
        %v253 = vld [vmem:[#allocation2] sm:$0xff]
        %v254 = vld [vmem:[%s240] sm:$0xff]
        %256 = vset.pattern.permute.xlu0 0
        %257 = vperm.xlu0 %256, %v253
        %v258 = vpop.permute.xlu0 %257
        %v260 = vlaneseq
        %v261 = vshrl.u32 %v260, 7
        %v262 = vsub.s32 0, %v261
        %v263 = vrot.slane %v254, %v262
        %v264 = vmul.f32 %v258, %v263
        %265 = vset.pattern.permute.xlu0 1
        %266 = vperm.xlu0 %265, %v253
        %v267 = vpop.permute.xlu0 %266
        %v269 = vlaneseq
        %v270 = vshrl.u32 %v269, 7
        %v271 = vsub.s32 1, %v270
        %v272 = vrot.slane %v254, %v271
        %v273 = vmul.f32 %v267, %v272
        %v274 = vadd.f32 %v264, %v273
        %275 = vset.pattern.permute.xlu0 2
        %276 = vperm.xlu0 %275, %v253
        %v277 = vpop.permute.xlu0 %276
        %v279 = vlaneseq
        %v280 = vshrl.u32 %v279, 7
        %v281 = vsub.s32 2, %v280
        %v282 = vrot.slane %v254, %v281
        %v283 = vmul.f32 %v277, %v282
        %v284 = vadd.f32 %v274, %v283
        %285 = vset.pattern.permute.xlu0 3
        %286 = vperm.xlu0 %285, %v253
        %v287 = vpop.permute.xlu0 %286
        %v289 = vlaneseq
        %v290 = vshrl.u32 %v289, 7
        %v291 = vsub.s32 3, %v290
        %v292 = vrot.slane %v254, %v291
        %v293 = vmul.f32 %v287, %v292
        %v294 = vadd.f32 %v284, %v293
        %v295 = vld [vmem:[%s4] sm:$0xff]
        %296 = vadd.xlane.f32.xlu0 %v294
        %v297 = vpop.xlane.xlu0 %296
        %v298 = vadd.f32 %v295, %v297
        %vm299 = vcmask 7168
        %300 = vst.msk [vmem:[%s4] sm:$0xff] %vm299, %v298
        %v301 = vld [vmem:[%s5] sm:$0xff]
        %v302 = vmul.f32 %v294, %v294
        %303 = vadd.xlane.f32.xlu0 %v302
        %v304 = vpop.xlane.xlu0 %303
        %v305 = vadd.f32 %v301, %v304
        %306 = vst.msk [vmem:[%s5] sm:$0xff] %vm299, %v305
        // Predicated region
        $region45: #{tpu_custom_call.1} parent=35 // pred_check
          _
        $region46: #{tpu_custom_call.1} parent=35 // pred_check_branch
          %308 = sbr.rel (%p246) target = $region48
        $region47: #{tpu_custom_call.1} parent=35 // pred_region
          %v309 = vld [vmem:[%s4] sm:$0xff]
          %v310 = vmul.f32 %v309, 0.03125
          %v311 = vld [vmem:[%s5] sm:$0xff]
          %v312 = vmul.f32 %v311, 0.03125
          %v313 = vmul.f32 %v310, %v310
          %v314 = vsub.f32 %v312, %v313
          %v315 = vmax.f32 %v314, 0.0
          %v316 = vld [vmem:[%s2] sm:$0xff]
          %v317 = vadd.f32 %v315, 1e-05
          %v318 = vrsqrt.pop %v317
          %v319 = vmul.f32 %v316, %v318
          %v320 = vld [vmem:[%s3] sm:$0xff]
          %v321 = vmul.f32 %v310, %v319
          %v322 = vsub.f32 %v320, %v321
          %323 = vst.msk [vmem:[%s4] sm:$0xff] %vm299, %v319
          %324 = vst.msk [vmem:[%s5] sm:$0xff] %vm299, %v322
        $region48: #{tpu_custom_call.1} parent=35 // pred_fallthru
          _
        // Predicated region
        $region49: #{tpu_custom_call.1} parent=35 // pred_check
          %p325 = pneg %p134
        $region50: #{tpu_custom_call.1} parent=35 // pred_check_branch
          %327 = sbr.rel (%p325) target = $region52
        $region51: #{tpu_custom_call.1} parent=35 // pred_region
          _
        $region52: #{tpu_custom_call.1} parent=35 // pred_fallthru
          _
        // Predicated region
        $region53: #{tpu_custom_call.1} parent=35 // pred_check
          %p328 = pneg %p155
        $region54: #{tpu_custom_call.1} parent=35 // pred_check_branch
          %330 = sbr.rel (%p328) target = $region56
        $region55: #{tpu_custom_call.1} parent=35 // pred_region
          _
        $region56: #{tpu_custom_call.1} parent=35 // pred_fallthru
          _
        // Predicated region
        $region57: #{tpu_custom_call.1} parent=35 // pred_check
          %p331 = pneg %p134
        $region58: #{tpu_custom_call.1} parent=35 // pred_check_branch
          %333 = sbr.rel (%p331) target = $region60
        $region59: #{tpu_custom_call.1} parent=35 // pred_region
          _
        $region60: #{tpu_custom_call.1} parent=35 // pred_fallthru
          _
        // Predicated region
        $region61: #{tpu_custom_call.1} parent=35 // pred_check
          %p334 = pneg %p155
        $region62: #{tpu_custom_call.1} parent=35 // pred_check_branch
          %336 = sbr.rel (%p334) target = $region64
        $region63: #{tpu_custom_call.1} parent=35 // pred_region
          _
        $region64: #{tpu_custom_call.1} parent=35 // pred_fallthru
          _
      $region36: #{tpu_custom_call.1} parent=5 // pred_fallthru
        _
      %p337 = scmp.le.s32.totalorder 2, %s13
      // Predicated region
      $region65: #{tpu_custom_call.1} parent=5 // pred_check
        %p338 = pneg %p337
      $region66: #{tpu_custom_call.1} parent=5 // pred_check_branch
        %340 = sbr.rel (%p338) target = $region68
      $region67: #{tpu_custom_call.1} parent=5 // pred_region
        %s341 = ssub.s32 %s13, 2
      $region68: #{tpu_custom_call.1} parent=5 // pred_fallthru
        _
    $region6: #{tpu_custom_call.1} parent=1 // loop_footer
      %s17 = sadd.s32 1, %s13
    $region7: #{tpu_custom_call.1} parent=1 // loop_footer_branch
      %12 = sbr.rel target = $region3
    $region8: #{tpu_custom_call.1} parent=1 // loop_exit
      _
    %342 = vsyncpa [#allocation3], 1
    %s343 = scalar_lea.sflag [#allocation3], 1
    %344 = vsyncpa %s343, 1

</llo_original>
